<compile_context>
chip_gen: v6e
topology: v6e:2x2x1
jax: 0.10.0
libtpu: 0.0.40
codegen_flags: <defaults>
</compile_context>

<pallas_src>
import jax
import jax.numpy as jnp
from jax.experimental import pallas as pl
from jax.experimental.pallas import tpu as pltpu


def _identity_alias_kernel(x_hbm_ref, o_hbm_ref):
    # DummyLayerNorm.forward(x) == x.  The output buffer *is* the input buffer
    # (input_output_aliases={0: 0}), so there is nothing to move.  touch()
    # pins a fake read+write dependency so the aliased output counts as
    # produced by this kernel.
    del x_hbm_ref
    pltpu.touch(o_hbm_ref)


def _identity_copy_kernel(x_hbm_ref, o_hbm_ref, sem):
    # Fallback: one whole-array HBM->HBM DMA (no VMEM staging, no vreg
    # traffic, no lane masking, no grid overhead).
    cp = pltpu.make_async_copy(x_hbm_ref, o_hbm_ref, sem)
    cp.start()
    cp.wait()


def _dummy_layer_norm_aliased(x):
    return pl.pallas_call(
        _identity_alias_kernel,
        out_shape=jax.ShapeDtypeStruct(x.shape, x.dtype),
        # Raw HBM refs: no auto-DMA into VMEM, no (8,128) block constraints.
        in_specs=[pl.BlockSpec(memory_space=pl.ANY)],
        out_specs=pl.BlockSpec(memory_space=pl.ANY),
        # Output 0 reuses input 0's buffer: zero bytes moved by this kernel.
        input_output_aliases={0: 0},
        cost_estimate=pl.CostEstimate(flops=0, transcendentals=0,
                                      bytes_accessed=0),
    )(x)


def _dummy_layer_norm_copy(x):
    nbytes = x.size * x.dtype.itemsize
    return pl.pallas_call(
        _identity_copy_kernel,
        out_shape=jax.ShapeDtypeStruct(x.shape, x.dtype),
        in_specs=[pl.BlockSpec(memory_space=pl.ANY)],
        out_specs=pl.BlockSpec(memory_space=pl.ANY),
        # Shaped (portable) DMA semaphore spelling.
        scratch_shapes=[pltpu.SemaphoreType.DMA(())],
        # True cost of the copy so XLA can overlap it with neighboring compute.
        cost_estimate=pl.CostEstimate(flops=0, transcendentals=0,
                                      bytes_accessed=2 * nbytes),
    )(x)


def dummy_layer_norm(x, normalized_shape=None, eps=1e-05):
    """Pallas implementation of DummyLayerNorm: identity on x.

    `normalized_shape` and `eps` are accepted for signature parity with the
    PyTorch module but are unused (the module ignores them too).

    NOTE: the cheapest correct production implementation is simply
    `return x`.  The pallas_call below is kept for kernel-composition parity;
    with the aliased output it costs zero HBM bytes and zero compute.
    """
    del normalized_shape, eps
    try:
        # Zero-copy path: aliased output + no-op body.
        return _dummy_layer_norm_aliased(x)
    except Exception:
        # Conservative fallback (previously validated): one HBM->HBM DMA.
        return _dummy_layer_norm_copy(x)


if __name__ == "__main__":
    key = jax.random.PRNGKey(0)
    # Small GPT-ish shape: batch=2, seq=8, hidden=32.
    x = jax.random.normal(key, (2, 8, 32), dtype=jnp.float32)

    y = dummy_layer_norm(x, normalized_shape=32, eps=1e-05)
    y = jax.block_until_ready(y)

    # Identity check against the reference semantics (forward returns x).
    assert y.shape == x.shape and y.dtype == x.dtype
    assert bool(jnp.array_equal(y, x))

    print("KERNEL_OK")
</pallas_src>

<mosaic_0001>
module attributes {stable_mosaic.version = 11 : i64} {
  func.func @_identity_alias_kernel(%arg0: memref<2x8x32xf32, #tpu.memory_space<any>>, %arg1: memref<2x8x32xf32, #tpu.memory_space<any>>) attributes {dimension_semantics = [], scalar_prefetch = 0 : i64, scratch_operands = 0 : i64, tpu.core_type = #tpu.core_type<tc>} {
    return
  }
}

module attributes {stable_mosaic.version = 11 : i64} {
  func.func @_identity_copy_kernel(%arg0: memref<2x8x32xf32, #tpu.memory_space<any>>, %arg1: memref<2x8x32xf32, #tpu.memory_space<any>>, %arg2: memref<!tpu.dma_semaphore, #tpu.memory_space<semaphore_mem>>) attributes {dimension_semantics = [], scalar_prefetch = 0 : i64, scratch_operands = 1 : i64, tpu.core_type = #tpu.core_type<tc>} {
    tpu.enqueue_dma source(%arg0 : memref<2x8x32xf32, #tpu.memory_space<any>>) target(%arg1 : memref<2x8x32xf32, #tpu.memory_space<any>>) target_semaphore(%arg2 : memref<!tpu.dma_semaphore, #tpu.memory_space<semaphore_mem>>)
    tpu.wait_dma2 semaphore(%arg2 : memref<!tpu.dma_semaphore, #tpu.memory_space<semaphore_mem>>) src(%arg0 : memref<2x8x32xf32, #tpu.memory_space<any>>) dst(%arg1 : memref<2x8x32xf32, #tpu.memory_space<any>>)
    return
  }
}

</mosaic_0001>

<llo_original>
// kernel: tpu_custom_call.1
$region0: #{tpu_custom_call.1}
  #allocation0 [shape = 'u32[]', space=smem, size = 0x4, offset = 0x4, fixed_abs, tag = 'smem constant byte address 0x4 - core index']
  #allocation1 [shape = 'u32[144,128]{1,0:T(1,128)}', space=vmem, size = 0x12000, scoped, tag = 'internal scratch']
  %s0 = inlined_call_operand.hbm [shape: f32[2,8,32], index: 0, kind: input, shape index: {}, may-alias: {0,1}]
  %s1 = inlined_call_operand.hbm [shape: f32[2,8,32], index: 1, kind: output, shape index: {}, may-alias: {0,1}]
  %s2 = sld [smem:[#allocation0]]
  $region2: #{tpu_custom_call.1} parent=0
    _
  %s4 = ssub.s32 1, %s2
  %s5 = scalar_select 0, %s4, %s2

// kernel: tpu_custom_call.1
$region0: #{tpu_custom_call.1}
  #allocation0 [shape = 'u32[]', space=smem, size = 0x4, offset = 0x4, fixed_abs, tag = 'smem constant byte address 0x4 - core index']
  #allocation1 [shape = 'u32[144,128]{1,0:T(1,128)}', space=vmem, size = 0x12000, scoped, tag = 'internal scratch']
  #allocation2 [shape = 's32[1]{0}', space=sflag, size = 0x4, scoped, tag = 'scratch operand']
  #allocation3 [shape = 's32[]', space=sflag, size = 0x4, offset = 0, fixed_abs, tag = 'sflag constant byte address 0x0 - dummy sync flag']
  #allocation4 [shape = 'u32[0]{0}', space=smem, size = 0, offset = 0, fixed_abs, tag = 'smem constant byte address 0x0 - null']
  %s0 = inlined_call_operand.hbm [shape: f32[2,8,32], index: 0, kind: input, shape index: {}]
  %s1 = inlined_call_operand.hbm [shape: f32[2,8,32], index: 1, kind: output, shape index: {}]
  %s2 = sld [smem:[#allocation0]]
  $region2: #{tpu_custom_call.1} parent=0
    _
  %s4 = ssub.s32 1, %s2
  %s5 = scalar_select 0, %s4, %s2
  %s7 = sshll.u32 1, 14
  %s8 = sxor.u32 4294967295, %s7
  %12 = dma.general %s0, 256, %s1, [#allocation2], 131072, [#allocation4], 0, 0
  %s13 = smul.u32 2, 8
  %s14 = smul.u32 %s13, 1
  %s15 = sshll.u32 %s14, 4
  %16 = dma.done [#allocation2], %s15
  %17 = vsyncmov [#allocation2]
  %s18 = vpop.sfrf %17
  %p19 = scmp.eq.s32.totalorder %s18, 0
  %p20 = pneg %p19
  %22 = shalt.err (%p20)

</llo_original>
